<compile_context>
chip_gen: v7x
topology: tpu7x:2x2x1
jax: 0.10.0
libtpu: 0.0.40
codegen_flags: <defaults>
</compile_context>

<pallas_src>
import jax
import jax.numpy as jnp
from jax.experimental import pallas as pl
from jax.experimental.pallas import tpu as pltpu


def _copy_kernel(x_ref, o_ref):
    # Faithful to an empty forward(): no arithmetic, just move the tile.
    o_ref[...] = x_ref[...]


def _pad_to(n: int, m: int) -> int:
    return ((n + m - 1) // m) * m


def transformer_pointnetpp_forward(x: jax.Array) -> jax.Array:
    """Pallas 'forward' for the stub TransformerPointNetPP module.

    Identity pass-through implemented as a row-tiled, lane-dense copy.
    """
    B, C, N = x.shape
    rows = B * C
    x2d = jnp.reshape(x, (rows, N))

    # Lane-align: N -> multiple of 128, rows -> multiple of 8 (f32 sublanes).
    n_pad = _pad_to(N, 128)
    r_pad = _pad_to(rows, 8)
    if n_pad != N or r_pad != rows:
        x2d = jnp.pad(x2d, ((0, r_pad - rows), (0, n_pad - N)))

    itemsize = jnp.dtype(x.dtype).itemsize

    # Row tile: largest candidate that (a) divides the padded row count and
    # (b) keeps one block under ~8 MiB, so it fits the scoped-VMEM defaults of
    # all TPU generations (16/32 MiB) with double-buffered in+out blocks.
    max_block_bytes = 8 * 1024 * 1024
    tile_r = r_pad
    for cand in (1024, 512, 256, 128, 64, 32, 16, 8):
        if cand <= r_pad and r_pad % cand == 0 and cand * n_pad * itemsize <= max_block_bytes:
            tile_r = cand
            break
    grid = (r_pad // tile_r,)

    cost = pl.CostEstimate(
        flops=0,
        transcendentals=0,
        bytes_accessed=2 * r_pad * n_pad * itemsize,
    )

    y2d = pl.pallas_call(
        _copy_kernel,
        out_shape=jax.ShapeDtypeStruct((r_pad, n_pad), x.dtype),
        grid=grid,
        in_specs=[pl.BlockSpec((tile_r, n_pad), lambda i: (i, 0))],
        out_specs=pl.BlockSpec((tile_r, n_pad), lambda i: (i, 0)),
        compiler_params=pltpu.CompilerParams(
            dimension_semantics=("parallel",),
        ),
        cost_estimate=cost,
    )(x2d)

    if n_pad != N or r_pad != rows:
        y2d = y2d[:rows, :N]
    return jnp.reshape(y2d, (B, C, N))


if __name__ == "__main__":
    key = jax.random.PRNGKey(0)
    # Small point-cloud-like input: batch=2, channels=8, points=128.
    # rows = B*C = 16 (multiple of 8, f32 sublanes), lanes = 128 (one vreg row).
    x = jax.random.normal(key, (2, 8, 128), dtype=jnp.float32)

    y = transformer_pointnetpp_forward(x)
    jax.block_until_ready(y)

    # Sanity check: empty forward == identity pass-through here.
    assert y.shape == x.shape and y.dtype == x.dtype
    assert bool(jnp.allclose(y, x))

    print("KERNEL_OK")
</pallas_src>

<mosaic_0001>
module attributes {stable_mosaic.version = 11 : i64} {
  func.func @_copy_kernel(%arg0: i32, %arg1: memref<16x128xf32, #tpu.memory_space<vmem>>, %arg2: memref<16x128xf32, #tpu.memory_space<vmem>>) attributes {dimension_semantics = [#tpu.dimension_semantics<parallel>], iteration_bounds = array<i64: 1>, scalar_prefetch = 0 : i64, scratch_operands = 0 : i64, tpu.core_type = #tpu.core_type<tc>, window_params = [{transform_indices = @transform_0, window_bounds = array<i64: 16, 128>}, {transform_indices = @transform_1, window_bounds = array<i64: 16, 128>}]} {
    %c0 = arith.constant 0 : index
    %c0_0 = arith.constant 0 : index
    %0 = vector.load %arg1[%c0, %c0_0] : memref<16x128xf32, #tpu.memory_space<vmem>>, vector<16x128xf32>
    %c0_1 = arith.constant 0 : index
    %c0_2 = arith.constant 0 : index
    %1 = vector.load %arg2[%c0_1, %c0_2] : memref<16x128xf32, #tpu.memory_space<vmem>>, vector<16x128xf32>
    tpu.vector_store %arg2[%c0_1, %c0_2], %0 {strides = array<i32>} : memref<16x128xf32, #tpu.memory_space<vmem>>, vector<16x128xf32>,
    return
  }
  func.func @transform_0(%arg0: i32) -> (i32, i32) {
    %c0_i32 = arith.constant 0 : i32
    %c0_i32_0 = arith.constant 0 : i32
    return %arg0, %c0_i32 : i32, i32
  }
  func.func @transform_1(%arg0: i32) -> (i32, i32) {
    %c0_i32 = arith.constant 0 : i32
    %c0_i32_0 = arith.constant 0 : i32
    return %arg0, %c0_i32 : i32, i32
  }
}

</mosaic_0001>

<llo_original>
// kernel: tpu_custom_call.1
$region0: #{tpu_custom_call.1}
  #allocation0 [shape = 'u32[]', space=smem, size = 0x4, offset = 0x4, fixed_abs, tag = 'smem constant byte address 0x4 - core index']
  #allocation1 [shape = 'u32[144,128]{1,0:T(1,128)}', space=vmem, size = 0x12000, scoped, tag = 'internal scratch']
  %s0 = inlined_call_operand.hbm [shape: f32[16,128], index: 0, kind: input, shape index: {}]
  %s1 = inlined_call_operand.hbm [shape: f32[16,128], index: 1, kind: output, shape index: {}]
  %s2 = sld [smem:[#allocation0]]
  $region18: #{tpu_custom_call.1} parent=0
    _
  %s4 = ssub.s32 1, %s2
  %s5 = scalar_select 0, %s4, %s2
  $region1: #{tpu_custom_call.1} parent=0
    #allocation2 [shape = 'u8[8192]{0}', space=vmem, size = 0x2000, scoped, tag = 'input window, operand 0, single buffered']
    #allocation3 [shape = 's32[1]{0}', space=sflag, size = 0x4, scoped, tag = 'scoped memory for tpu_custom_call.1']
    #allocation4 [shape = 's32[1]{0}', space=sflag, size = 0x4, scoped, tag = 'scoped memory for tpu_custom_call.1']
    #allocation5 [shape = 'u8[8192]{0}', space=vmem, size = 0x2000, scoped, tag = 'output window, operand 0, single buffered']
    %6 = vsyncpa [#allocation3], 0
    %7 = vsyncpa [#allocation4], 0
    // Predicated region
    $region2: #{tpu_custom_call.1} parent=1 // pred_check
      _
    $region3: #{tpu_custom_call.1} parent=1 // pred_check_branch
      %9 = sbr.rel (0) target = $region5
    $region4: #{tpu_custom_call.1} parent=1 // pred_region
      %s11 = ssub.s32 256, 256
      %12 = vsyncadd [#allocation3], %s11
      %s13 = sshll.u32 [#allocation2], 4
      %s14 = int_to_ptr.vmem [resolvable:$true] %s13
      %19 = dma.hbm_to_vmem [thread:$0]  %s0, 256, %s14, [#allocation3], 128, 128, 8
    $region5: #{tpu_custom_call.1} parent=1 // pred_fallthru
      _
    // Predicated region
    $region6: #{tpu_custom_call.1} parent=1 // pred_check
      _
    $region7: #{tpu_custom_call.1} parent=1 // pred_check_branch
      %21 = sbr.rel (0) target = $region9
    $region8: #{tpu_custom_call.1} parent=1 // pred_region
      %22 = dma.done [#allocation3], 256
    $region9: #{tpu_custom_call.1} parent=1 // pred_fallthru
      _
    %v23 = vld [vmem:[#allocation2] sm:$0xff]
    %v24 = vld [vmem:[#allocation2 + $0x8] sm:$0xff]
    %25 = vst [vmem:[#allocation5] sm:$0xff] %v23
    %26 = vst [vmem:[#allocation5 + $0x8] sm:$0xff] %v24
    // Predicated region
    $region10: #{tpu_custom_call.1} parent=1 // pred_check
      _
    $region11: #{tpu_custom_call.1} parent=1 // pred_check_branch
      %28 = sbr.rel (0) target = $region13
    $region12: #{tpu_custom_call.1} parent=1 // pred_region
      %s30 = ssub.s32 256, 256
      %31 = vsyncadd [#allocation4], %s30
      %s32 = sshll.u32 [#allocation5], 4
      %s33 = int_to_ptr.vmem [resolvable:$true] %s32
      %38 = dma.vmem_to_hbm [thread:$0]  %s33, 256, %s1, [#allocation4], 128, 128, 8
    $region13: #{tpu_custom_call.1} parent=1 // pred_fallthru
      _
    // Predicated region
    $region14: #{tpu_custom_call.1} parent=1 // pred_check
      _
    $region15: #{tpu_custom_call.1} parent=1 // pred_check_branch
      %40 = sbr.rel (0) target = $region17
    $region16: #{tpu_custom_call.1} parent=1 // pred_region
      %41 = dma.done [#allocation4], 256
    $region17: #{tpu_custom_call.1} parent=1 // pred_fallthru
      _
    %42 = vsyncpa [#allocation3], 1
    %43 = vsyncpa [#allocation4], 1

</llo_original>
